<compile_context>
chip_gen: v7x
topology: tpu7x:2x2x1
jax: 0.10.0
libtpu: 0.0.40
codegen_flags: <defaults>
</compile_context>

<pallas_src>
import functools

import jax
import jax.numpy as jnp
from jax import lax
from jax.experimental import pallas as pl
from jax.experimental.pallas import tpu as pltpu


def _grad_loss_kernel(s_ref, out_ref, acc_dx_ref, acc_dy_ref, *,
                      n_true, tm, rows_per_slab, W, HW, steps_per_core,
                      inv_n_dx, inv_n_dy, penalty):
    i = pl.program_id(0)            # parallel axis (TensorCore shard)
    j = pl.program_id(1)            # arbitrary (reduction) axis

    # ---- init vector accumulators at the start of this core's sweep ----
    @pl.when(j == 0)
    def _():
        acc_dx_ref[...] = jnp.zeros_like(acc_dx_ref)
        acc_dy_ref[...] = jnp.zeros_like(acc_dy_ref)

    # Intended (unclamped) global row offset of this tile; rows >= n_true are
    # padding/garbage (partial last block or clamped tail block) -> masked.
    row0 = (i * steps_per_core + j) * tm

    # dx validity: flattened position p holds s[p+1]-s[p]; it is an x-gradient
    # only when p is not the last column of an image row.  Hoisted once.
    col = lax.broadcasted_iota(jnp.int32, (rows_per_slab, HW - 1), 1)
    dx_mask = (col % W) != (W - 1)

    num_slabs = tm // rows_per_slab

    def slab_body(k, carry):
        r = pl.multiple_of(k * rows_per_slab, rows_per_slab)
        s = s_ref[pl.ds(r, rows_per_slab), :].astype(jnp.float32)

        # Zero out rows that fall past the true number of images.
        gr = lax.broadcasted_iota(jnp.int32, (rows_per_slab, 1), 0) + (row0 + r)
        s = jnp.where(gr < n_true, s, 0.0)

        dx = s[:, 1:] - s[:, :-1]          # (rows, HW-1)
        dy = s[:, W:] - s[:, :-W]          # (rows, HW-W)  -- no mask needed
        if penalty == "l2":                # |d|^2 == d^2, matches torch ref
            dx = dx * dx
            dy = dy * dy
        else:                              # 'l1'
            dx = jnp.abs(dx)
            dy = jnp.abs(dy)
        dx = jnp.where(dx_mask, dx, 0.0)

        # Pure elementwise accumulation in the hot loop (no cross-lane work).
        acc_dx_ref[...] += dx
        acc_dy_ref[...] += dy
        return carry

    lax.fori_loop(0, num_slabs, slab_body, 0, unroll=(num_slabs <= 4))

    # ---- finalize: single sublane+lane reduction, write per-core partial ----
    @pl.when(j == pl.num_programs(1) - 1)
    def _():
        sdx = jnp.sum(jnp.sum(acc_dx_ref[...], axis=0, keepdims=True),
                      axis=1, keepdims=True)                       # (1, 1)
        sdy = jnp.sum(jnp.sum(acc_dy_ref[...], axis=0, keepdims=True),
                      axis=1, keepdims=True)                       # (1, 1)
        loss_tile = 0.5 * (sdx * inv_n_dx + sdy * inv_n_dy)
        out_ref[...] = loss_tile.reshape(1, 1, 1)


def gradient_loss(s, penalty="l2", *, target_tile_bytes=8 << 20):
    """s: (B, C, H, W) float array -> scalar loss (GradientLoss.forward)."""
    B, C, H, W = s.shape
    assert H >= 2 and W >= 2, "gradient loss needs H >= 2 and W >= 2"
    N = B * C
    HW = H * W

    # Free, contiguous reshape; keep the native dtype (no HBM up-cast pass).
    s2 = s.reshape(N, HW)
    dtype_bytes = s2.dtype.itemsize
    bytes_per_img = HW * dtype_bytes

    # Sublane granule for this dtype (f32: 8, bf16/f16: 16, int8/fp8: 32).
    g = max(8, 32 // dtype_bytes)

    # Tile rows (= images) per grid step: multiple of g, >= g, within the
    # ~8 MiB budget, and not wastefully larger than the (rounded-up) problem.
    tm = (target_tile_bytes // bytes_per_img) // g * g
    tm = max(g, tm)
    tm = min(tm, pl.cdiv(N, g) * g)

    # Inner slab size: bounded live range (<= ~1 MiB of f32 intermediates).
    rows_per_slab = g
    while rows_per_slab > 1 and rows_per_slab * HW * 4 > (1 << 20):
        rows_per_slab //= 2

    P = 2                                  # shard the reduction across v7x's 2 TCs
    nb = pl.cdiv(N, tm)                    # real input blocks
    spc = pl.cdiv(nb, P)                   # grid steps per core
    grid = (P, spc)

    inv_n_dx = 1.0 / float(N * H * (W - 1))
    inv_n_dy = 1.0 / float(N * (H - 1) * W)

    kernel = functools.partial(
        _grad_loss_kernel,
        n_true=N, tm=tm, rows_per_slab=rows_per_slab, W=W, HW=HW,
        steps_per_core=spc, inv_n_dx=inv_n_dx, inv_n_dy=inv_n_dy,
        penalty=penalty)

    tile_bytes = tm * bytes_per_img
    vmem_limit = int(min(96 << 20, max(32 << 20, 3 * tile_bytes + (8 << 20))))

    partials = pl.pallas_call(
        kernel,
        out_shape=jax.ShapeDtypeStruct((P, 1, 1), jnp.float32),
        grid_spec=pltpu.PrefetchScalarGridSpec(
            num_scalar_prefetch=0,
            grid=grid,
            in_specs=[pl.BlockSpec(
                (tm, HW),
                # Clamp excess tail steps onto the last real block; the kernel
                # masks them (and the partial last block) to zero by row index.
                lambda i, j: (jnp.minimum(i * spc + j, nb - 1), 0))],
            out_specs=pl.BlockSpec((1, 1, 1), lambda i, j: (i, 0, 0)),
            scratch_shapes=[
                pltpu.VMEM((rows_per_slab, HW - 1), jnp.float32),   # acc dx
                pltpu.VMEM((rows_per_slab, HW - W), jnp.float32),   # acc dy
            ],
        ),
        compiler_params=pltpu.CompilerParams(
            dimension_semantics=("parallel", "arbitrary"),
            vmem_limit_bytes=vmem_limit,
        ),
        cost_estimate=pl.CostEstimate(
            flops=6 * N * HW,
            transcendentals=0,
            bytes_accessed=N * HW * dtype_bytes + P * 4,
        ),
    )(s2)

    return jnp.sum(partials[:, 0, 0])


if __name__ == "__main__":
    B, C, H, W = 2, 4, 16, 16
    key = jax.random.PRNGKey(0)
    x = jax.random.normal(key, (B, C, H, W), dtype=jnp.float32)

    loss_l2 = gradient_loss(x, penalty="l2")
    loss_l1 = gradient_loss(x, penalty="l1")
    jax.block_until_ready((loss_l2, loss_l1))

    # Pure-JAX reference (mirrors the PyTorch forward).
    dy = jnp.abs(x[:, :, 1:, :] - x[:, :, :-1, :])
    dx = jnp.abs(x[:, :, :, 1:] - x[:, :, :, :-1])
    ref_l2 = (jnp.mean(dx * dx) + jnp.mean(dy * dy)) / 2.0
    ref_l1 = (jnp.mean(dx) + jnp.mean(dy)) / 2.0

    assert loss_l2.shape == ()
    assert jnp.allclose(loss_l2, ref_l2, rtol=1e-5, atol=1e-6), (loss_l2, ref_l2)
    assert jnp.allclose(loss_l1, ref_l1, rtol=1e-5, atol=1e-6), (loss_l1, ref_l1)

    # bf16 passthrough path (no wrapper up-cast; kernel casts per-slab).
    xb = x.astype(jnp.bfloat16)
    loss_b = gradient_loss(xb, penalty="l2")
    jax.block_until_ready(loss_b)
    xf = xb.astype(jnp.float32)
    dyb = xf[:, :, 1:, :] - xf[:, :, :-1, :]
    dxb = xf[:, :, :, 1:] - xf[:, :, :, :-1]
    ref_b = (jnp.mean(dxb * dxb) + jnp.mean(dyb * dyb)) / 2.0
    assert jnp.allclose(loss_b, ref_b, rtol=1e-3, atol=1e-5), (loss_b, ref_b)

    print("KERNEL_OK")
</pallas_src>

<mosaic_0001>
module attributes {stable_mosaic.version = 11 : i64} {
  func.func @_grad_loss_kernel(%arg0: i32, %arg1: i32, %arg2: memref<8x256xf32, #tpu.memory_space<vmem>>, %arg3: memref<1x1x1xf32, #tpu.memory_space<vmem>>, %arg4: memref<8x255xf32, #tpu.memory_space<vmem>>, %arg5: memref<8x240xf32, #tpu.memory_space<vmem>>) attributes {dimension_semantics = [#tpu.dimension_semantics<parallel>, #tpu.dimension_semantics<arbitrary>], iteration_bounds = array<i64: 2, 1>, scalar_prefetch = 0 : i64, scratch_operands = 2 : i64, tpu.core_type = #tpu.core_type<tc>, window_params = [{transform_indices = @transform_0, window_bounds = array<i64: 8, 256>}, {transform_indices = @transform_1, window_bounds = array<i64: 1, 1, 1>}]} {
    %c0_i32 = arith.constant 0 : i32
    %0 = arith.cmpi eq, %arg1, %c0_i32 : i32
    %1 = arith.extui %0 : i1 to i32
    %c0_i32_0 = arith.constant 0 : i32
    %2 = arith.cmpi ne, %1, %c0_i32_0 : i32
    scf.if %2 {
      %cst_21 = arith.constant 0.000000e+00 : f32
      %58 = vector.broadcast %cst_21 : f32 to vector<8x255xf32>
      %c0_22 = arith.constant 0 : index
      %c0_23 = arith.constant 0 : index
      %59 = vector.load %arg4[%c0_22, %c0_23] : memref<8x255xf32, #tpu.memory_space<vmem>>, vector<8x255xf32>
      tpu.vector_store %arg4[%c0_22, %c0_23], %58 {strides = array<i32>} : memref<8x255xf32, #tpu.memory_space<vmem>>, vector<8x255xf32>,
      %cst_24 = arith.constant 0.000000e+00 : f32
      %60 = vector.broadcast %cst_24 : f32 to vector<8x240xf32>
      %c0_25 = arith.constant 0 : index
      %c0_26 = arith.constant 0 : index
      %61 = vector.load %arg5[%c0_25, %c0_26] : memref<8x240xf32, #tpu.memory_space<vmem>>, vector<8x240xf32>
      tpu.vector_store %arg5[%c0_25, %c0_26], %60 {strides = array<i32>} : memref<8x240xf32, #tpu.memory_space<vmem>>, vector<8x240xf32>,
    } else {
    }
    %c1_i32 = arith.constant 1 : i32
    %3 = arith.muli %arg0, %c1_i32 : i32
    %4 = arith.addi %3, %arg1 : i32
    %c8_i32 = arith.constant 8 : i32
    %5 = arith.muli %4, %c8_i32 : i32
    %6 = tpu.iota {dimensions = array<i32: 1>} : vector<8x255xi32>
    %c16_i32 = arith.constant 16 : i32
    %c0_i32_1 = arith.constant 0 : i32
    %7 = arith.cmpi eq, %c16_i32, %c0_i32_1 : i32
    %c1_i32_2 = arith.constant 1 : i32
    %8 = arith.select %7, %c1_i32_2, %c16_i32 : i32
    %9 = vector.broadcast %8 : i32 to vector<8x255xi32>
    %10 = arith.remsi %6, %9 : vector<8x255xi32>
    %c0_i32_3 = arith.constant 0 : i32
    %11 = vector.broadcast %c0_i32_3 : i32 to vector<8x255xi32>
    %12 = arith.cmpi ne, %10, %11 : vector<8x255xi32>
    %c0_i32_4 = arith.constant 0 : i32
    %13 = vector.broadcast %c0_i32_4 : i32 to vector<8x255xi32>
    %14 = arith.cmpi slt, %10, %13 : vector<8x255xi32>
    %c0_i32_5 = arith.constant 0 : i32
    %15 = arith.cmpi slt, %8, %c0_i32_5 : i32
    %16 = vector.broadcast %15 : i1 to vector<8x255xi1>
    %17 = vector.broadcast %16 : vector<8x255xi1> to vector<8x255xi1>
    %18 = arith.xori %14, %17 : vector<8x255xi1>
    %19 = arith.andi %18, %12 : vector<8x255xi1>
    %20 = vector.broadcast %8 : i32 to vector<8x255xi32>
    %21 = arith.addi %10, %20 : vector<8x255xi32>
    %22 = arith.select %19, %21, %10 : vector<8x255xi1>, vector<8x255xi32>
    %c15_i32 = arith.constant 15 : i32
    %23 = vector.broadcast %c15_i32 : i32 to vector<8x255xi32>
    %24 = arith.cmpi ne, %22, %23 : vector<8x255xi32>
    %c0_i32_6 = arith.constant 0 : i32
    %c8_i32_7 = arith.constant 8 : i32
    %25 = arith.muli %c0_i32_6, %c8_i32_7 : i32
    %26 = tpu.assume_multiple %25, 8 : i32
    %27 = arith.index_cast %26 : i32 to index
    %c0 = arith.constant 0 : index
    %28 = vector.load %arg2[%27, %c0] : memref<8x256xf32, #tpu.memory_space<vmem>>, vector<8x256xf32>
    %29 = tpu.iota {dimensions = array<i32: 0>} : vector<8x1xi32>
    %30 = arith.addi %5, %26 : i32
    %31 = vector.broadcast %30 : i32 to vector<8x1xi32>
    %32 = arith.addi %29, %31 : vector<8x1xi32>
    %c8_i32_8 = arith.constant 8 : i32
    %33 = vector.broadcast %c8_i32_8 : i32 to vector<8x1xi32>
    %34 = arith.cmpi slt, %32, %33 : vector<8x1xi32>
    %cst = arith.constant 0.000000e+00 : f32
    %35 = vector.shape_cast %34 : vector<8x1xi1> to vector<8x1xi1>
    %36 = vector.broadcast %35 : vector<8x1xi1> to vector<8x256xi1>
    %37 = vector.broadcast %cst : f32 to vector<8x256xf32>
    %38 = arith.select %36, %28, %37 : vector<8x256xi1>, vector<8x256xf32>
    %39 = vector.extract_strided_slice %38 {offsets = [0, 1], sizes = [8, 255], strides = [1, 1]} : vector<8x256xf32> to vector<8x255xf32>
    %40 = vector.extract_strided_slice %38 {offsets = [0, 0], sizes = [8, 255], strides = [1, 1]} : vector<8x256xf32> to vector<8x255xf32>
    %41 = arith.subf %39, %40 : vector<8x255xf32>
    %42 = vector.extract_strided_slice %38 {offsets = [0, 16], sizes = [8, 240], strides = [1, 1]} : vector<8x256xf32> to vector<8x240xf32>
    %43 = vector.extract_strided_slice %38 {offsets = [0, 0], sizes = [8, 240], strides = [1, 1]} : vector<8x256xf32> to vector<8x240xf32>
    %44 = arith.subf %42, %43 : vector<8x240xf32>
    %45 = arith.mulf %41, %41 : vector<8x255xf32>
    %46 = arith.mulf %44, %44 : vector<8x240xf32>
    %cst_9 = arith.constant 0.000000e+00 : f32
    %47 = vector.broadcast %cst_9 : f32 to vector<8x255xf32>
    %48 = arith.select %24, %45, %47 : vector<8x255xi1>, vector<8x255xf32>
    %c0_10 = arith.constant 0 : index
    %c0_11 = arith.constant 0 : index
    %49 = vector.load %arg4[%c0_10, %c0_11] : memref<8x255xf32, #tpu.memory_space<vmem>>, vector<8x255xf32>
    %50 = arith.addf %49, %48 : vector<8x255xf32>
    %c0_12 = arith.constant 0 : index
    %c0_13 = arith.constant 0 : index
    %51 = vector.load %arg4[%c0_12, %c0_13] : memref<8x255xf32, #tpu.memory_space<vmem>>, vector<8x255xf32>
    tpu.vector_store %arg4[%c0_12, %c0_13], %50 {strides = array<i32>} : memref<8x255xf32, #tpu.memory_space<vmem>>, vector<8x255xf32>,
    %c0_14 = arith.constant 0 : index
    %c0_15 = arith.constant 0 : index
    %52 = vector.load %arg5[%c0_14, %c0_15] : memref<8x240xf32, #tpu.memory_space<vmem>>, vector<8x240xf32>
    %53 = arith.addf %52, %46 : vector<8x240xf32>
    %c0_16 = arith.constant 0 : index
    %c0_17 = arith.constant 0 : index
    %54 = vector.load %arg5[%c0_16, %c0_17] : memref<8x240xf32, #tpu.memory_space<vmem>>, vector<8x240xf32>
    tpu.vector_store %arg5[%c0_16, %c0_17], %53 {strides = array<i32>} : memref<8x240xf32, #tpu.memory_space<vmem>>, vector<8x240xf32>,
    %c1_i32_18 = arith.constant 1 : i32
    %c0_i32_19 = arith.constant 0 : i32
    %55 = arith.cmpi eq, %arg1, %c0_i32_19 : i32
    %56 = arith.extui %55 : i1 to i32
    %c0_i32_20 = arith.constant 0 : i32
    %57 = arith.cmpi ne, %56, %c0_i32_20 : i32
    scf.if %57 {
      %c0_21 = arith.constant 0 : index
      %c0_22 = arith.constant 0 : index
      %58 = vector.load %arg4[%c0_21, %c0_22] : memref<8x255xf32, #tpu.memory_space<vmem>>, vector<8x255xf32>
      %cst_23 = arith.constant dense<0.000000e+00> : vector<255xf32>
      %59 = vector.multi_reduction <add>, %58, %cst_23 [0] : vector<8x255xf32> to vector<255xf32>
      %60 = vector.shape_cast %59 : vector<255xf32> to vector<1x255xf32>
      %cst_24 = arith.constant dense<0.000000e+00> : vector<1xf32>
      %61 = vector.multi_reduction <add>, %60, %cst_24 [1] : vector<1x255xf32> to vector<1xf32>
      %62 = vector.shape_cast %61 : vector<1xf32> to vector<1x1xf32>
      %c0_25 = arith.constant 0 : index
      %c0_26 = arith.constant 0 : index
      %63 = vector.load %arg5[%c0_25, %c0_26] : memref<8x240xf32, #tpu.memory_space<vmem>>, vector<8x240xf32>
      %cst_27 = arith.constant dense<0.000000e+00> : vector<240xf32>
      %64 = vector.multi_reduction <add>, %63, %cst_27 [0] : vector<8x240xf32> to vector<240xf32>
      %65 = vector.shape_cast %64 : vector<240xf32> to vector<1x240xf32>
      %cst_28 = arith.constant dense<0.000000e+00> : vector<1xf32>
      %66 = vector.multi_reduction <add>, %65, %cst_28 [1] : vector<1x240xf32> to vector<1xf32>
      %67 = vector.shape_cast %66 : vector<1xf32> to vector<1x1xf32>
      %cst_29 = arith.constant 5.2083336E-4 : f32
      %68 = vector.broadcast %cst_29 : f32 to vector<1x1xf32>
      %69 = arith.mulf %62, %68 : vector<1x1xf32>
      %cst_30 = arith.constant 5.2083336E-4 : f32
      %70 = vector.broadcast %cst_30 : f32 to vector<1x1xf32>
      %71 = arith.mulf %67, %70 : vector<1x1xf32>
      %72 = arith.addf %69, %71 : vector<1x1xf32>
      %cst_31 = arith.constant 5.000000e-01 : f32
      %73 = vector.broadcast %cst_31 : f32 to vector<1x1xf32>
      %74 = arith.mulf %73, %72 : vector<1x1xf32>
      %75 = vector.shape_cast %74 : vector<1x1xf32> to vector<1x1x1xf32>
      %c0_32 = arith.constant 0 : index
      %c0_33 = arith.constant 0 : index
      %c0_34 = arith.constant 0 : index
      %76 = vector.load %arg3[%c0_32, %c0_33, %c0_34] : memref<1x1x1xf32, #tpu.memory_space<vmem>>, vector<1x1x1xf32>
      tpu.vector_store %arg3[%c0_32, %c0_33, %c0_34], %75 {strides = array<i32>} : memref<1x1x1xf32, #tpu.memory_space<vmem>>, vector<1x1x1xf32>,
    } else {
    }
    return
  }
  func.func @transform_0(%arg0: i32, %arg1: i32) -> (i32, i32) {
    %c1_i32 = arith.constant 1 : i32
    %0 = arith.muli %arg0, %c1_i32 : i32
    %1 = arith.addi %0, %arg1 : i32
    %c0_i32 = arith.constant 0 : i32
    %2 = arith.minsi %1, %c0_i32 : i32
    %c0_i32_0 = arith.constant 0 : i32
    %c0_i32_1 = arith.constant 0 : i32
    return %2, %c0_i32_0 : i32, i32
  }
  func.func @transform_1(%arg0: i32, %arg1: i32) -> (i32, i32, i32) {
    %c0_i32 = arith.constant 0 : i32
    %c0_i32_0 = arith.constant 0 : i32
    %c0_i32_1 = arith.constant 0 : i32
    return %arg0, %c0_i32, %c0_i32_0 : i32, i32, i32
  }
}

</mosaic_0001>

<llo_original>
// kernel: tpu_custom_call.1
$region0: #{tpu_custom_call.1}
  #allocation0 [shape = 'u32[]', space=smem, size = 0x4, offset = 0x4, fixed_abs, tag = 'smem constant byte address 0x4 - core index']
  #allocation1 [shape = 'u32[144,128]{1,0:T(1,128)}', space=vmem, size = 0x12000, scoped, tag = 'internal scratch']
  #allocation2 [shape = 'f32[8,255]{1,0:T(8,128)}', space=vmem, size = 0x2000, scoped, tag = 'scratch operand']
  #allocation3 [shape = 'f32[8,240]{1,0:T(8,128)}', space=vmem, size = 0x2000, scoped, tag = 'scratch operand']
  %s0 = inlined_call_operand.hbm [shape: f32[8,256], index: 0, kind: input, shape index: {}]
  %s1 = inlined_call_operand.vmem [shape: f32[2,1,1], index: 1, kind: output, shape index: {}]
  %s2 = sld [smem:[#allocation0]]
  $region49: #{tpu_custom_call.1} parent=0
    _
  %s4 = ssub.s32 1, %s2
  %s5 = scalar_select 0, %s4, %s2
  $region1: #{tpu_custom_call.1} parent=0
    #allocation4 [shape = 'u8[16384]{0}', space=vmem, size = 0x4000, scoped, tag = 'input window, operand 0']
    #allocation5 [shape = 's32[2]{0}', space=sflag, size = 0x8, scoped, tag = 'scoped memory for tpu_custom_call.1']
    %6 = vsyncpa [#allocation5], 0
    %s7 = scalar_lea.sflag [#allocation5], 1
    %8 = vsyncpa %s7, 0
    loop: start=0, step=1, limit=4
    $region2: #{tpu_custom_call.1} parent=1 // loop_pre_header
      _
    $region3: #{tpu_custom_call.1} parent=1 // loop_header
      %s10 = sphi 0, %s14
      %p11 = scmp.ge.s32.totalorder %s10, 4
      %s17 = sphi 0, %s29
      %s18 = sphi 0, %s25
      %s19 = sphi 0, %s17
      %s20 = sphi 0, %s18
      %s21 = sphi 0, %s19
      %s22 = sphi 0, %s20
      %s38 = sphi 0, %s40
      %s41 = sphi 0, %s38
      %s42 = sphi 0, %s41
      %s58 = sphi 0, %s42
      %s64 = sphi 0, %s66
      %s67 = sphi 0, %s64
      %s68 = sphi 0, %s67
      %s84 = sphi 0, %s68
    $region4: #{tpu_custom_call.1} parent=1 // loop_header_branch
      %13 = sbr.rel (%p11) target = $region8
    $region5: #{tpu_custom_call.1} parent=1 // loop_body
      %s15 = ssub.s32 %s10, 1
      %s16 = ssub.s32 %s10, 2
      %s23 = sadd.s32 1, %s18
      %p24 = scmp.ge.s32.totalorder %s23, 1
      %s25 = scalar_select %p24, 0, %s23
      %s26 = sadd.s32 1, %s17
      %s27 = scalar_select %p24, %s26, %s17
      %p28 = scmp.ge.s32.totalorder %s27, 2
      %s29 = scalar_select %p28, 0, %s27
      %s30 = sadd.s32 %s17, %s18
      %p31 = scmp.lt.s32.totalorder %s30, 0
      %s32 = scalar_select %p31, %s30, 0
      %s33 = sadd.s32 %s29, %s25
      %p34 = scmp.lt.s32.totalorder %s33, 0
      %s35 = scalar_select %p34, %s33, 0
      %s36 = ssub.s32 %s32, %s35
      %p37 = scmp.eq.s32.totalorder %s36, 0
      %s39 = sadd.s32 %s38, 1
      %s40 = scalar_select %p37, %s38, %s39
      %p43 = pneg %p37
      %p44 = scmp.eq.s32.totalorder %s10, 1
      %p45 = por %p43, %p44
      %p46 = scmp.ne.s32.totalorder %s38, %s41
      %p47 = scmp.eq.s32.totalorder %s10, 0
      %p48 = por %p46, %p47
      %p49 = scmp.ne.s32.totalorder %s38, %s41
      %p50 = scmp.eq.s32.totalorder %s15, 1
      %p51 = por %p49, %p50
      %p52 = scmp.ne.s32.totalorder %s41, %s42
      %p53 = scmp.eq.s32.totalorder %s15, 0
      %p54 = por %p52, %p53
      %p55 = scmp.ne.s32.totalorder %s41, %s42
      %p56 = scmp.eq.s32.totalorder %s16, 1
      %p57 = por %p55, %p56
      %p59 = scmp.ne.s32.totalorder %s42, %s58
      %p60 = scmp.eq.s32.totalorder %s16, 0
      %p61 = por %p59, %p60
      %s62 = ssub.s32 %s17, %s29
      %p63 = scmp.eq.s32.totalorder %s62, 0
      %s65 = sadd.s32 %s64, 1
      %s66 = scalar_select %p63, %s64, %s65
      %p69 = pneg %p63
      %p70 = scmp.eq.s32.totalorder %s10, 1
      %p71 = por %p69, %p70
      %p72 = scmp.ne.s32.totalorder %s64, %s67
      %p73 = scmp.eq.s32.totalorder %s10, 0
      %p74 = por %p72, %p73
      %p75 = scmp.ne.s32.totalorder %s64, %s67
      %p76 = scmp.eq.s32.totalorder %s15, 1
      %p77 = por %p75, %p76
      %p78 = scmp.ne.s32.totalorder %s67, %s68
      %p79 = scmp.eq.s32.totalorder %s15, 0
      %p80 = por %p78, %p79
      %p81 = scmp.ne.s32.totalorder %s67, %s68
      %p82 = scmp.eq.s32.totalorder %s16, 1
      %p83 = por %p81, %p82
      %p85 = scmp.ne.s32.totalorder %s68, %s84
      %p86 = scmp.eq.s32.totalorder %s16, 0
      %p87 = por %p85, %p86
      %p88 = scmp.le.s32.totalorder 1, %s10
      %p89 = scmp.lt.s32.totalorder %s10, 3
      %p90 = pnand %p88, %p89
      %p91 = pneg %p90
      // Predicated region
      $region9: #{tpu_custom_call.1} parent=5 // pred_check
        _
      $region10: #{tpu_custom_call.1} parent=5 // pred_check_branch
        %93 = sbr.rel (%p90) target = $region12
      $region11: #{tpu_custom_call.1} parent=5 // pred_region
        %s94 = ssub.s32 %s10, 1
      $region12: #{tpu_custom_call.1} parent=5 // pred_fallthru
        _
      %p95 = scmp.lt.s32.totalorder %s10, 2
      // Predicated region
      $region13: #{tpu_custom_call.1} parent=5 // pred_check
        %p96 = pneg %p95
      $region14: #{tpu_custom_call.1} parent=5 // pred_check_branch
        %98 = sbr.rel (%p96) target = $region16
      $region15: #{tpu_custom_call.1} parent=5 // pred_region
        // Predicated region
        $region17: #{tpu_custom_call.1} parent=15 // pred_check
          %p99 = pneg %p48
        $region18: #{tpu_custom_call.1} parent=15 // pred_check_branch
          %101 = sbr.rel (%p99) target = $region20
        $region19: #{tpu_custom_call.1} parent=15 // pred_region
          %s102 = sand.u32 %s38, 1
          %s103 = scalar_lea.sflag [#allocation5], %s102
          %s104 = sand.u32 %s38, 1
          %s105 = smul.addr %s104, 16
          %s106 = scalar_lea.vmem [#allocation4], %s105
          %s107 = sadd.s32 %s17, %s18
          %p108 = scmp.lt.s32.totalorder %s107, 0
          %s109 = scalar_select %p108, %s107, 0
          %s111 = ssub.s32 256, 256
          %112 = vsyncadd %s103, %s111
          %s113 = smul.addr %s109, 2
          %s114 = smul.addr %s113, 128
          %s115 = scalar_lea.hbm %s0, %s114
          %s117 = sshll.u32 %s106, 4
          %s118 = int_to_ptr.vmem [resolvable:$true] %s117
          %120 = dma.hbm_to_vmem [thread:$0]  %s115, 256, %s118, %s103
        $region20: #{tpu_custom_call.1} parent=15 // pred_fallthru
          _
      $region16: #{tpu_custom_call.1} parent=5 // pred_fallthru
        _
      %p121 = scmp.le.s32.totalorder 1, %s10
      %p122 = scmp.lt.s32.totalorder %s10, 3
      %p123 = pnand %p121, %p122
      %p124 = pneg %p123
      // Predicated region
      $region21: #{tpu_custom_call.1} parent=5 // pred_check
        _
      $region22: #{tpu_custom_call.1} parent=5 // pred_check_branch
        %126 = sbr.rel (%p123) target = $region24
      $region23: #{tpu_custom_call.1} parent=5 // pred_region
        %s127 = ssub.s32 %s10, 1
        %s128 = sand.u32 %s41, 1
        %s129 = scalar_lea.sflag [#allocation5], %s128
        %s130 = sand.u32 %s41, 1
        %s131 = smul.addr %s130, 16
        %s132 = scalar_lea.vmem [#allocation4], %s131
        // Predicated region
        $region25: #{tpu_custom_call.1} parent=23 // pred_check
          %p133 = pneg %p54
        $region26: #{tpu_custom_call.1} parent=23 // pred_check_branch
          %135 = sbr.rel (%p133) target = $region28
        $region27: #{tpu_custom_call.1} parent=23 // pred_region
          %136 = dma.done %s129, 256
        $region28: #{tpu_custom_call.1} parent=23 // pred_fallthru
          _
        %s137 = sand.u32 %s41, 1
        %s138 = scalar_lea.sflag [#allocation5], %s137
        %s139 = sand.u32 %s41, 1
        %s140 = smul.addr %s139, 16
        %s141 = scalar_lea.vmem [#allocation4], %s140
        %p142 = pneg %p54
        %p143 = pneg %p51
        %p144 = pneg %p80
        %p145 = pneg %p77
        %p146 = scmp.lt.s32.totalorder %s19, 1
        %s147 = scalar_select %p146, %s19, 1
        %s148 = scalar_lea.vmem %s1, %s147
        %s149 = sadd.s32 %s19, %s20
        %p150 = scmp.lt.s32.totalorder %s149, 0
        %s151 = scalar_select %p150, %s149, 0
        %p152 = scmp.lt.s32.totalorder %s19, 1
        %s153 = scalar_select %p152, %s19, 1
        %s154 = scalar_lea.vmem %s1, %s153
        %p155 = scmp.eq.s32.totalorder %s20, 0
        // Predicated region
        $region29: #{tpu_custom_call.1} parent=23 // pred_check
          %p156 = pneg %p155
        $region30: #{tpu_custom_call.1} parent=23 // pred_check_branch
          %158 = sbr.rel (%p156) target = $region32
        $region31: #{tpu_custom_call.1} parent=23 // pred_region
          %159 = vst [vmem:[#allocation2] sm:$0xff] 0.0
          %vm160 = vcmask 1039360
          %161 = vst.msk [vmem:[#allocation2 + $0x8] sm:$0xff] %vm160, 0.0
          %162 = vst [vmem:[#allocation3] sm:$0xff] 0.0
          %vm163 = vcmask 916480
          %164 = vst.msk [vmem:[#allocation3 + $0x8] sm:$0xff] %vm163, 0.0
        $region32: #{tpu_custom_call.1} parent=23 // pred_fallthru
          _
        %s165 = sadd.s32 %s19, %s20
        %s166 = smul.u32 %s165, 8
        %v167 = vlaneseq
        %v168 = vand.u32 %v167, 127
        %v169 = vadd.s32 %v168, 128
        %vm170 = vcmp.lt.s32.totalorder %v168, 0
        %v171 = vsub.s32 0, %v168
        %v172 = vsel %vm170, %v171, %v168
        %v173 = vshrl.u32 %v172, 4
        %v174 = vand.u32 %v172, 15
        %v175 = vsub.s32 0, %v174
        %v176 = vsel %vm170, %v175, %v174
        %vm177 = vcmp.lt.s32.totalorder %v169, 0
        %v178 = vsub.s32 0, %v169
        %v179 = vsel %vm177, %v178, %v169
        %v180 = vshrl.u32 %v179, 4
        %v181 = vand.u32 %v179, 15
        %v182 = vsub.s32 0, %v181
        %v183 = vsel %vm177, %v182, %v181
        %vm184 = vcmp.ne.s32.totalorder %v176, 0
        %vm185 = vcmp.ne.s32.totalorder %v183, 0
        %vm186 = vcmp.lt.s32.totalorder %v176, 0
        %vm187 = vcmp.lt.s32.totalorder %v183, 0
        %vm188 = vmand %vm186, %vm184
        %vm189 = vmand %vm187, %vm185
        %v190 = vadd.s32 %v176, 16
        %v191 = vadd.s32 %v183, 16
        %v192 = vsel %vm188, %v190, %v176
        %v193 = vsel %vm189, %v191, %v183
        %vm194 = vcmp.ne.s32.totalorder %v192, 15
        %vm195 = vcmp.ne.s32.totalorder %v193, 15
        %s196 = smul.u32 0, 2
        %s197 = smul.addr %s196, 8
        %s198 = scalar_lea.vmem %s132, %s197 [#allocation4]
        %v199 = vld [vmem:[%s198] sm:$0xff]
        %v200 = vld [vmem:[%s198 + $0x8] sm:$0xff]
        %v201 = vlaneseq
        %v202 = vshrl.u32 %v201, 7
        %s203 = sadd.s32 %s166, 0
        %v204 = vstv %s203
        %v205 = vadd.s32 %v202, %v204
        %vm206 = vcmp.lt.s32.totalorder %v205, 8
        %v207 = vsel %vm206, 1, 0
        %vm208 = vcmp.eq.s32.totalorder %v207, 1
        %v209 = vsel %vm208, %v199, 0.0
        %v210 = vsel %vm208, %v200, 0.0
        %213 = vrot.lane.b32.xlu0 %v209, 1
        %v214 = vpop.permute.xlu0 %213
        %215 = vrot.lane.b32.xlu0 %v210, 1
        %v216 = vpop.permute.xlu0 %215
        %vm217 = vcmask 7168
        %v218 = vsel %vm217, %v214, %v216
        %v221 = vsub.f32 %v209, %v214
        %v222 = vsub.f32 %v210, %v218
        %223 = vrot.lane.b32.xlu0 %v209, 16
        %v224 = vpop.permute.xlu0 %223
        %225 = vrot.lane.b32.xlu0 %v210, 16
        %v226 = vpop.permute.xlu0 %225
        %vm227 = vcmask 130048
        %v228 = vsel %vm227, %v224, %v226
        %v231 = vsub.f32 %v209, %v224
        %v232 = vsub.f32 %v210, %v228
        %v233 = vmul.f32 %v221, %v221
        %v234 = vmul.f32 %v222, %v222
        %v235 = vmul.f32 %v231, %v231
        %v236 = vmul.f32 %v232, %v232
        %239 = vrot.lane.b32.xlu0 %v233, 127
        %v240 = vpop.permute.xlu0 %239
        %241 = vrot.lane.b32.xlu0 %v234, 127
        %v242 = vpop.permute.xlu0 %241
        %vm243 = vcmask 1039360
        %v244 = vsel %vm243, %v240, %v242
        %v247 = vsel %vm194, %v244, 0.0
        %v248 = vsel %vm195, %v242, 0.0
        %v249 = vld [vmem:[#allocation2] sm:$0xff]
        %v250 = vld [vmem:[#allocation2 + $0x8] sm:$0xff]
        %v251 = vadd.f32 %v249, %v247
        %v252 = vadd.f32 %v250, %v248
        %253 = vst [vmem:[#allocation2] sm:$0xff] %v251
        %254 = vst.msk [vmem:[#allocation2 + $0x8] sm:$0xff] %vm243, %v252
        %v255 = vld [vmem:[#allocation3] sm:$0xff]
        %v256 = vld [vmem:[#allocation3 + $0x8] sm:$0xff]
        %259 = vrot.lane.b32.xlu0 %v235, 112
        %v260 = vpop.permute.xlu0 %259
        %261 = vrot.lane.b32.xlu0 %v236, 112
        %v262 = vpop.permute.xlu0 %261
        %vm263 = vcmask 916480
        %v264 = vsel %vm263, %v260, %v262
        %v267 = vadd.f32 %v255, %v264
        %v268 = vadd.f32 %v256, %v262
        %269 = vst [vmem:[#allocation3] sm:$0xff] %v267
        %270 = vst.msk [vmem:[#allocation3 + $0x8] sm:$0xff] %vm263, %v268
        // Predicated region
        $region33: #{tpu_custom_call.1} parent=23 // pred_check
          %p271 = pneg %p155
        $region34: #{tpu_custom_call.1} parent=23 // pred_check_branch
          %273 = sbr.rel (%p271) target = $region36
        $region35: #{tpu_custom_call.1} parent=23 // pred_region
          %v274 = vld [vmem:[#allocation2] sm:$0xff]
          %v275 = vld [vmem:[#allocation2 + $0x8] sm:$0xff]
          %v276 = vrot.slane %v274, 4
          %v277 = vadd.f32 %v274, %v276
          %v278 = vrot.slane %v277, 2
          %v279 = vadd.f32 %v277, %v278
          %v280 = vrot.slane %v279, 1
          %v281 = vadd.f32 %v279, %v280
          %v282 = vsel %vm243, %v275, 0.0
          %v283 = vrot.slane %v282, 4
          %v284 = vadd.f32 %v282, %v283
          %v285 = vrot.slane %v284, 2
          %v286 = vadd.f32 %v284, %v285
          %v287 = vrot.slane %v286, 1
          %v288 = vadd.f32 %v286, %v287
          %v289 = vsel %vm243, %v288, 0.0
          %v290 = vadd.f32 %v281, %v289
          %291 = vadd.xlane.f32.xlu0 %v290
          %v292 = vpop.xlane.xlu0 %291
          %v293 = vld [vmem:[#allocation3] sm:$0xff]
          %v294 = vld [vmem:[#allocation3 + $0x8] sm:$0xff]
          %v295 = vrot.slane %v293, 4
          %v296 = vadd.f32 %v293, %v295
          %v297 = vrot.slane %v296, 2
          %v298 = vadd.f32 %v296, %v297
          %v299 = vrot.slane %v298, 1
          %v300 = vadd.f32 %v298, %v299
          %v301 = vsel %vm263, %v294, 0.0
          %v302 = vrot.slane %v301, 4
          %v303 = vadd.f32 %v301, %v302
          %v304 = vrot.slane %v303, 2
          %v305 = vadd.f32 %v303, %v304
          %v306 = vrot.slane %v305, 1
          %v307 = vadd.f32 %v305, %v306
          %v308 = vsel %vm263, %v307, 0.0
          %v309 = vadd.f32 %v300, %v308
          %310 = vadd.xlane.f32.xlu0 %v309
          %v311 = vpop.xlane.xlu0 %310
          %v312 = vmul.f32 %v292, 0.00052083336
          %v313 = vmul.f32 %v311, 0.00052083336
          %v314 = vadd.f32 %v312, %v313
          %v315 = vmul.f32 %v314, 0.5
          %vm316 = vcmask 0
          %317 = vst.msk [vmem:[%s154] sm:$0x1] %vm316, %v315
        $region36: #{tpu_custom_call.1} parent=23 // pred_fallthru
          _
        %p318 = scmp.lt.s32.totalorder %s19, 1
        %s319 = scalar_select %p318, %s19, 1
        %s320 = scalar_lea.vmem %s1, %s319
        // Predicated region
        $region37: #{tpu_custom_call.1} parent=23 // pred_check
          %p321 = pneg %p77
        $region38: #{tpu_custom_call.1} parent=23 // pred_check_branch
          %323 = sbr.rel (%p321) target = $region40
        $region39: #{tpu_custom_call.1} parent=23 // pred_region
          _
        $region40: #{tpu_custom_call.1} parent=23 // pred_fallthru
          _
      $region24: #{tpu_custom_call.1} parent=5 // pred_fallthru
        _
      %p324 = scmp.le.s32.totalorder 2, %s10
      // Predicated region
      $region41: #{tpu_custom_call.1} parent=5 // pred_check
        %p325 = pneg %p324
      $region42: #{tpu_custom_call.1} parent=5 // pred_check_branch
        %327 = sbr.rel (%p325) target = $region44
      $region43: #{tpu_custom_call.1} parent=5 // pred_region
        %s328 = ssub.s32 %s10, 2
        // Predicated region
        $region45: #{tpu_custom_call.1} parent=43 // pred_check
          %p329 = pneg %p83
        $region46: #{tpu_custom_call.1} parent=43 // pred_check_branch
          %331 = sbr.rel (%p329) target = $region48
        $region47: #{tpu_custom_call.1} parent=43 // pred_region
          %p332 = scmp.lt.s32.totalorder %s21, 1
          %s333 = scalar_select %p332, %s21, 1
          %s334 = scalar_lea.vmem %s1, %s333
        $region48: #{tpu_custom_call.1} parent=43 // pred_fallthru
          _
      $region44: #{tpu_custom_call.1} parent=5 // pred_fallthru
        _
    $region6: #{tpu_custom_call.1} parent=1 // loop_footer
      %s14 = sadd.s32 1, %s10
    $region7: #{tpu_custom_call.1} parent=1 // loop_footer_branch
      %9 = sbr.rel target = $region3
    $region8: #{tpu_custom_call.1} parent=1 // loop_exit
      _
    %335 = vsyncpa [#allocation5], 1
    %s336 = scalar_lea.sflag [#allocation5], 1
    %337 = vsyncpa %s336, 1

</llo_original>
